<compile_context>
chip_gen: v6e
topology: v6e:2x2x1
jax: 0.10.0
libtpu: 0.0.40
codegen_flags: <defaults>
</compile_context>

<pallas_src>
import functools

import numpy as np
import jax
import jax.numpy as jnp
from jax.experimental import pallas as pl
from jax.experimental.pallas import tpu as pltpu


# ----------------------------------------------------------------------------
# Host-side: deterministic reconstruction of pywt's 'morl' CWT (conv method).
# ----------------------------------------------------------------------------
def _morlet_psi(t):
    # pywt 'morl': psi(t) = exp(-t^2/2) * cos(5 t), support [-8, 8]
    return np.exp(-0.5 * t * t) * np.cos(5.0 * t)


def _central_frequency_morl(precision=8):
    # Replicates pywt.central_frequency('morl', precision=8)  (== 0.8125)
    p = 2 ** precision
    x = np.linspace(-8.0, 8.0, p)
    psi = _morlet_psi(x)
    domain = x[-1] - x[0]
    index = int(np.argmax(np.abs(np.fft.fft(psi)[1:]))) + 2
    if index > len(psi) / 2:
        index = len(psi) - index + 2
    return 1.0 / (domain / (index - 1))


def _round_up(x, m):
    return ((x + m - 1) // m) * m


def _build_cwt_matrix_packed(scales, n_samples, k_pad, cols_pad, precision=10):
    """Fused CWT-as-matmul weights, crop baked into the column layout.

    W_all has shape (k_pad, cols_pad).  For a zero-padded signal row x (length k_pad):
        |x @ W_all|[s * n_samples + t] == |pywt.cwt(x, scales[s], 'morl')[t]|,  t < n_samples
    mirroring pywt.cwt's conv path (convolve with reversed resampled integrated psi,
    diff, -sqrt(a) scale, center crop).  Columns are packed scale-major / time-minor
    with NO per-scale padding; only the total column count is padded to cols_pad.
    All padding rows / columns are exactly zero."""
    p = 2 ** precision
    x = np.linspace(-8.0, 8.0, p)
    step = x[1] - x[0]
    int_psi = np.cumsum(_morlet_psi(x)) * step

    N = n_samples
    t_idx = np.arange(N)[:, None]
    k_idx = np.arange(N)[None, :]

    W_all = np.zeros((k_pad, cols_pad), dtype=np.float32)
    for si, a in enumerate(scales):
        j = (np.arange(a * (x[-1] - x[0]) + 1) / (a * step)).astype(int)
        j = j[j < int_psi.size]
        filt = int_psi[j][::-1]
        L = filt.size
        d = (L - 2) / 2.0
        m0 = int(np.floor(d)) if d > 0 else 0

        def gather(idx):
            valid = (idx >= 0) & (idx < L)
            return np.where(valid, filt[np.clip(idx, 0, L - 1)], 0.0)

        W = -np.sqrt(a) * (gather(t_idx + m0 + 1 - k_idx)
                           - gather(t_idx + m0 - k_idx))       # W[t, k]
        W_all[:N, si * N:(si + 1) * N] = W.T                   # columns packed s*N + t
    return W_all


# ----------------------------------------------------------------------------
# Pallas kernels:  Y = |X @ W|  tiled over (M tile, output-column tile[, K tile]).
# ----------------------------------------------------------------------------
def _cwt_kernel_single(x_ref, w_ref, o_ref, *, precision):
    # Single contraction pass: one MXU matmul, |.| fused into the single store.
    part = jnp.dot(x_ref[...], w_ref[...],
                   preferred_element_type=jnp.float32, precision=precision)
    o_ref[...] = jnp.abs(part).astype(o_ref.dtype)


def _cwt_kernel_ktiled(x_ref, w_ref, o_ref, acc_ref, *, k_tile, precision):
    # Split contraction (very long signals): accumulate in an f32 VMEM scratch,
    # write the output tile exactly once on the last K step (abs + cast fused).
    k = pl.program_id(2)
    nk = pl.num_programs(2)
    start = pl.multiple_of(k * k_tile, 128)
    part = jnp.dot(x_ref[:, pl.ds(start, k_tile)], w_ref[...],
                   preferred_element_type=jnp.float32, precision=precision)

    @pl.when(k == 0)
    def _():
        acc_ref[...] = part

    @pl.when(k > 0)
    def _():
        acc_ref[...] += part

    @pl.when(k == nk - 1)
    def _():
        o_ref[...] = jnp.abs(acc_ref[...]).astype(o_ref.dtype)


# ----------------------------------------------------------------------------
# Per-TPU-generation VMEM budgets.
# ----------------------------------------------------------------------------
_GEN_CONFIGS = {
    # plan_budget keeps headroom under vmem_limit_bytes for compiler scratch.
    "v5e":     dict(vmem_limit=64 << 20, w_tile_budget=8 << 20,
                    plan_budget=40 << 20, m_tile_max=128),
    "v6e":     dict(vmem_limit=96 << 20, w_tile_budget=16 << 20,
                    plan_budget=64 << 20, m_tile_max=256),
    "v7x":     dict(vmem_limit=48 << 20, w_tile_budget=6 << 20,
                    plan_budget=36 << 20, m_tile_max=256),
    "default": dict(vmem_limit=48 << 20, w_tile_budget=6 << 20,
                    plan_budget=36 << 20, m_tile_max=128),
}


def _tpu_generation():
    try:
        kind = jax.devices()[0].device_kind.lower()
    except Exception:
        return "default"
    if "v6" in kind:
        return "v6e"
    if "v7" in kind or "7x" in kind:
        return "v7x"
    if "v5p" in kind or "v4" in kind:
        return "v6e"          # 128 MiB physical VMEM -> v6e budgets are safe
    if "v5" in kind:
        return "v5e"
    return "default"


class WaveletImageTransform:
    """JAX/Pallas port of the non-trainable PyTorch WaveletImageTransform.

    Input:  (B, Chans, Samples)
    Output: (B, 1, Chans * n_freqs, Samples), float32 by default (PyTorch semantics);
            out_dtype=bfloat16 halves output writeback bytes if the consumer allows.
    """

    _COL_TILE_CANDIDATES = (2048, 1024, 512, 256, 128)
    _K_SPLIT = 512    # contraction tile when a single pass would not fit VMEM

    def __init__(self, sfreq=500, fmin=1, fmax=8, n_freqs=8, wavelet_name='morl',
                 n_jobs=-1, compute_dtype=jnp.bfloat16, out_dtype=jnp.float32):
        assert wavelet_name == 'morl', "only 'morl' is implemented"
        del n_jobs
        self.sfreq = sfreq
        self.n_freqs = n_freqs
        self.freqs = np.linspace(fmin, fmax, n_freqs)
        self.scales = _central_frequency_morl() * sfreq / self.freqs
        self.compute_dtype = jnp.dtype(compute_dtype)
        self.out_dtype = jnp.dtype(out_dtype)
        # bf16 path: a single MXU pass and half the streamed W bytes.  The f32 path
        # keeps HIGHEST (full f32 emulation) as a bit-accurate reference only.
        self.precision = (None if self.compute_dtype == jnp.bfloat16
                          else jax.lax.Precision.HIGHEST)
        self._cfg = _GEN_CONFIGS[_tpu_generation()]
        self._cache = {}

    # --- tiling plan: budgets every (double-buffered) VMEM resident -------------
    def _plan(self, n_rows, n_samples):
        S = self.n_freqs
        it = self.compute_dtype.itemsize
        out_it = self.out_dtype.itemsize
        m_align = 16 if min(it, out_it) == 2 else 8
        m_full = _round_up(max(n_rows, 1), m_align)
        m_tile = min(m_full, self._cfg["m_tile_max"])

        cols = _round_up(S * n_samples, 128)
        w_budget = self._cfg["w_tile_budget"]
        plan_budget = self._cfg["plan_budget"]

        def vmem_bytes(np_, k_tile, col_tile, n_k):
            x_b = 2 * m_tile * np_ * it                    # resident X block (x2 buffers)
            w_b = 2 * k_tile * col_tile * it               # streamed W tile  (x2 buffers)
            o_b = 2 * m_tile * col_tile * out_it           # output tile      (x2 buffers)
            a_b = m_tile * col_tile * 4 if n_k > 1 else 0  # f32 accumulator scratch
            return x_b + w_b + o_b + a_b

        def pick_col_tile(np_, k_tile, n_k):
            best = None
            for ct in self._COL_TILE_CANDIDATES:
                if ct > cols:
                    continue
                if k_tile * ct * it > w_budget:
                    continue
                if vmem_bytes(np_, k_tile, ct, n_k) > plan_budget:
                    continue
                cols_pad = _round_up(cols, ct)
                key = (cols_pad, -ct)          # least column padding, then widest tile
                if best is None or key < best[0]:
                    best = (key, ct, cols_pad)
            return best

        # Preferred: single contraction pass (k_tile == Np): one matmul + one store
        # per grid step, no accumulator scratch, no output re-visits.
        np_single = _round_up(n_samples, 128)
        best = pick_col_tile(np_single, np_single, 1)
        if best is not None:
            _, col_tile, cols_pad = best
            return dict(m_tile=m_tile, n_pad=np_single, k_tile=np_single,
                        col_tile=col_tile, cols_pad=cols_pad, n_k=1)

        # Very long signals: split the contraction axis.
        k_tile = self._K_SPLIT
        np_split = _round_up(n_samples, k_tile)
        n_k = np_split // k_tile
        best = pick_col_tile(np_split, k_tile, n_k)
        if best is None:                       # last resort: narrowest lane-dense tile
            col_tile, cols_pad = 128, _round_up(cols, 128)
        else:
            _, col_tile, cols_pad = best
        return dict(m_tile=m_tile, n_pad=np_split, k_tile=k_tile,
                    col_tile=col_tile, cols_pad=cols_pad, n_k=n_k)

    # --- cached, pre-tiled block-contiguous weights ------------------------------
    def _weights(self, n_rows, n_samples):
        key = (n_rows, n_samples)
        if key not in self._cache:
            plan = self._plan(n_rows, n_samples)
            w_np = _build_cwt_matrix_packed(self.scales, n_samples,
                                            plan["n_pad"], plan["cols_pad"])
            n_col = plan["cols_pad"] // plan["col_tile"]
            # Block-contiguous (n_col, Kp, col_tile): each streamed weight tile is one
            # contiguous DMA run instead of a strided gather of 128-wide rows.
            w_np = np.ascontiguousarray(
                w_np.reshape(plan["n_pad"], n_col, plan["col_tile"]).transpose(1, 0, 2))
            w = jnp.asarray(w_np, dtype=self.compute_dtype)
            self._cache[key] = (w, plan)
        return self._cache[key]

    # --- forward -----------------------------------------------------------------
    def __call__(self, x):
        B, C, N = x.shape
        S = self.n_freqs
        w, plan = self._weights(B * C, N)
        m_tile, Np = plan["m_tile"], plan["n_pad"]
        k_tile, col_tile = plan["k_tile"], plan["col_tile"]
        cols_pad, n_k = plan["cols_pad"], plan["n_k"]

        M = B * C
        Mp = _round_up(M, m_tile)
        x2 = jnp.asarray(x, jnp.float32).reshape(M, N)
        x2 = jnp.pad(x2, ((0, Mp - M), (0, Np - N))).astype(self.compute_dtype)

        n_m = Mp // m_tile
        n_col = cols_pad // col_tile

        if n_k == 1:
            kernel = functools.partial(_cwt_kernel_single, precision=self.precision)
            grid = (n_m, n_col)
            in_specs = [
                # signal: block index constant along the column axis -> stays resident
                pl.BlockSpec((m_tile, Np), lambda m, j: (m, 0)),
                # weights: one contiguous (Np, col_tile) slab per column tile
                pl.BlockSpec((None, Np, col_tile), lambda m, j: (j, 0, 0)),
            ]
            out_specs = pl.BlockSpec((m_tile, col_tile), lambda m, j: (m, j))
            scratch = []
            dims = ("parallel", "parallel")
        else:
            kernel = functools.partial(_cwt_kernel_ktiled, k_tile=k_tile,
                                       precision=self.precision)
            grid = (n_m, n_col, n_k)
            in_specs = [
                pl.BlockSpec((m_tile, Np), lambda m, j, k: (m, 0)),
                pl.BlockSpec((None, k_tile, col_tile), lambda m, j, k: (j, k, 0)),
            ]
            out_specs = pl.BlockSpec((m_tile, col_tile), lambda m, j, k: (m, j))
            scratch = [pltpu.VMEM((m_tile, col_tile), jnp.float32)]
            dims = ("parallel", "parallel", "arbitrary")

        y = pl.pallas_call(
            kernel,
            out_shape=jax.ShapeDtypeStruct((Mp, cols_pad), self.out_dtype),
            grid_spec=pltpu.PrefetchScalarGridSpec(
                num_scalar_prefetch=0,
                grid=grid,
                in_specs=in_specs,
                out_specs=out_specs,
                scratch_shapes=scratch),
            compiler_params=pltpu.CompilerParams(
                dimension_semantics=dims,
                vmem_limit_bytes=self._cfg["vmem_limit"]),
        )(x2, w)

        # Rows are (b, c)-major; columns are (s, t)-major with the crop baked in, so
        # only the trailing pad is sliced off and the rest is a pure reshape
        # (no interior crop, no transpose pass over the output).
        return y[:M, :S * N].reshape(B, 1, C * S, N)


# ----------------------------------------------------------------------------
# Pure-numpy reference of the same CWT (convolve + diff + crop), for validation.
# ----------------------------------------------------------------------------
def _reference_forward(x_np, scales, n_freqs, precision=10):
    B, C, N = x_np.shape
    p = 2 ** precision
    xg = np.linspace(-8.0, 8.0, p)
    step = xg[1] - xg[0]
    int_psi = np.cumsum(_morlet_psi(xg)) * step
    out = np.zeros((B, 1, C * n_freqs, N), dtype=np.float32)
    for b in range(B):
        for c in range(C):
            sig = x_np[b, c].astype(np.float64)
            for si, a in enumerate(scales):
                j = (np.arange(a * (xg[-1] - xg[0]) + 1) / (a * step)).astype(int)
                j = j[j < int_psi.size]
                filt = int_psi[j][::-1]
                conv = np.convolve(sig, filt)
                coef = -np.sqrt(a) * np.diff(conv)
                d = (coef.shape[-1] - N) / 2.0
                if d > 0:
                    coef = coef[int(np.floor(d)):-int(np.ceil(d))]
                out[b, 0, c * n_freqs + si, :] = np.abs(coef)
    return out


if __name__ == "__main__":
    B, C, N = 2, 4, 128
    n_freqs = 8
    key = jax.random.PRNGKey(0)
    x = jax.random.normal(key, (B, C, N), dtype=jnp.float32)

    # sfreq chosen small so the wavelet filter lengths stay modest for the demo.
    mod_fast = WaveletImageTransform(sfreq=64, fmin=1, fmax=8, n_freqs=n_freqs)       # bf16 perf path
    mod_ref = WaveletImageTransform(sfreq=64, fmin=1, fmax=8, n_freqs=n_freqs,
                                    compute_dtype=jnp.float32)                         # exact reference path

    out = jax.block_until_ready(mod_fast(x))
    out_f32 = jax.block_until_ready(mod_ref(x))

    assert out.shape == (B, 1, C * n_freqs, N), out.shape
    assert out.dtype == jnp.float32
    assert out_f32.shape == out.shape

    ref = _reference_forward(np.asarray(x), mod_fast.scales, n_freqs)
    # Exact-math path (f32 weights, HIGHEST MXU emulation) must match tightly.
    np.testing.assert_allclose(np.asarray(out_f32), ref, rtol=2e-3, atol=2e-3)
    # Default fast path: bf16 quantization of X and W with f32 accumulation.
    np.testing.assert_allclose(np.asarray(out), ref, rtol=5e-2, atol=5e-2)

    print("KERNEL_OK")
</pallas_src>

<mosaic_0001>
module attributes {stable_mosaic.version = 11 : i64} {
  func.func @_cwt_kernel_single(%arg0: i32, %arg1: i32, %arg2: memref<16x128xbf16, #tpu.memory_space<vmem>>, %arg3: memref<1x128x1024xbf16, #tpu.memory_space<vmem>>, %arg4: memref<16x1024xf32, #tpu.memory_space<vmem>>) attributes {dimension_semantics = [#tpu.dimension_semantics<parallel>, #tpu.dimension_semantics<parallel>], iteration_bounds = array<i64: 1, 1>, scalar_prefetch = 0 : i64, scratch_operands = 0 : i64, tpu.core_type = #tpu.core_type<tc>, window_params = [{transform_indices = @transform_0, window_bounds = array<i64: 16, 128>}, {transform_indices = @transform_1, window_bounds = array<i64: 1, 128, 1024>}, {transform_indices = @transform_2, window_bounds = array<i64: 16, 1024>}]} {
    %c0 = arith.constant 0 : index
    %c0_0 = arith.constant 0 : index
    %0 = vector.load %arg2[%c0, %c0_0] : memref<16x128xbf16, #tpu.memory_space<vmem>>, vector<16x128xbf16>
    %c0_1 = arith.constant 0 : index
    %c0_2 = arith.constant 0 : index
    %c0_3 = arith.constant 0 : index
    %1 = vector.load %arg3[%c0_1, %c0_2, %c0_3] : memref<1x128x1024xbf16, #tpu.memory_space<vmem>>, vector<1x128x1024xbf16>
    %2 = vector.shape_cast %1 : vector<1x128x1024xbf16> to vector<128x1024xbf16>
    %cst = arith.constant dense<0.000000e+00> : vector<16x1024xf32>
    %3 = tpu.matmul %0, %2, %cst {dimension_numbers = #tpu.dot_dimension_numbers<[1], [0], [0], [1], [0, 0, 1, 1], [], []>} : vector<16x128xbf16>, vector<128x1024xbf16>, vector<16x1024xf32> -> vector<16x1024xf32>
    %4 = math.absf %3 : vector<16x1024xf32>
    %c0_4 = arith.constant 0 : index
    %c0_5 = arith.constant 0 : index
    %5 = vector.load %arg4[%c0_4, %c0_5] : memref<16x1024xf32, #tpu.memory_space<vmem>>, vector<16x1024xf32>
    tpu.vector_store %arg4[%c0_4, %c0_5], %4 {strides = array<i32>} : memref<16x1024xf32, #tpu.memory_space<vmem>>, vector<16x1024xf32>,
    return
  }
  func.func @transform_0(%arg0: i32, %arg1: i32) -> (i32, i32) {
    %c0_i32 = arith.constant 0 : i32
    %c0_i32_0 = arith.constant 0 : i32
    return %arg0, %c0_i32 : i32, i32
  }
  func.func @transform_1(%arg0: i32, %arg1: i32) -> (i32, i32, i32) {
    %c0_i32 = arith.constant 0 : i32
    %c0_i32_0 = arith.constant 0 : i32
    %c0_i32_1 = arith.constant 0 : i32
    return %arg1, %c0_i32, %c0_i32_0 : i32, i32, i32
  }
  func.func @transform_2(%arg0: i32, %arg1: i32) -> (i32, i32) {
    %c0_i32 = arith.constant 0 : i32
    return %arg0, %arg1 : i32, i32
  }
}

</mosaic_0001>

<llo_original>
// kernel: tpu_custom_call.1
$region0: #{tpu_custom_call.1}
  #allocation0 [shape = 'u32[]', space=smem, size = 0x4, offset = 0x4, fixed_abs, tag = 'smem constant byte address 0x4 - core index']
  #allocation1 [shape = 'u32[144,128]{1,0:T(1,128)}', space=vmem, size = 0x12000, scoped, tag = 'internal scratch']
  %s0 = inlined_call_operand.hbm [shape: bf16[16,128], index: 0, kind: input, shape index: {}]
  %s1 = inlined_call_operand.hbm [shape: bf16[1,128,1024], index: 1, kind: input, shape index: {}]
  %s2 = inlined_call_operand.hbm [shape: f32[16,1024], index: 2, kind: output, shape index: {}]
  %s3 = sld [smem:[#allocation0]]
  $region26: #{tpu_custom_call.1} parent=0
    _
  %s5 = ssub.s32 1, %s3
  %s6 = scalar_select 0, %s5, %s3
  $region1: #{tpu_custom_call.1} parent=0
    #allocation2 [shape = 'u8[4096]{0}', space=vmem, size = 0x1000, scoped, tag = 'input window, operand 0, single buffered']
    #allocation3 [shape = 's32[1]{0}', space=sflag, size = 0x4, scoped, tag = 'scoped memory for tpu_custom_call.1']
    #allocation4 [shape = 's32[1]{0}', space=sflag, size = 0x4, scoped, tag = 'scoped memory for tpu_custom_call.1']
    #allocation5 [shape = 'u8[262144]{0}', space=vmem, size = 0x40000, scoped, tag = 'input window, operand 1, single buffered']
    #allocation6 [shape = 's32[1]{0}', space=sflag, size = 0x4, scoped, tag = 'scoped memory for tpu_custom_call.1']
    #allocation7 [shape = 'u8[65536]{0}', space=vmem, size = 0x10000, scoped, tag = 'output window, operand 0, single buffered']
    %7 = vsyncpa [#allocation3], 0
    %8 = vsyncpa [#allocation6], 0
    %9 = vsyncpa [#allocation4], 0
    // Predicated region
    $region2: #{tpu_custom_call.1} parent=1 // pred_check
      _
    $region3: #{tpu_custom_call.1} parent=1 // pred_check_branch
      %11 = sbr.rel (0) target = $region5
    $region4: #{tpu_custom_call.1} parent=1 // pred_region
      %s13 = ssub.s32 128, 128
      %14 = vsyncadd [#allocation3], %s13
      %s15 = sshll.u32 [#allocation2], 4
      %s16 = int_to_ptr.vmem [resolvable:$true] %s15
      %21 = dma.hbm_to_vmem [thread:$0]  %s0, 128, %s16, [#allocation3], 64, 64, 4
    $region5: #{tpu_custom_call.1} parent=1 // pred_fallthru
      _
    // Predicated region
    $region6: #{tpu_custom_call.1} parent=1 // pred_check
      _
    $region7: #{tpu_custom_call.1} parent=1 // pred_check_branch
      %23 = sbr.rel (0) target = $region9
    $region8: #{tpu_custom_call.1} parent=1 // pred_region
      %s25 = ssub.s32 8192, 8192
      %26 = vsyncadd [#allocation6], %s25
      %s27 = sshll.u32 [#allocation5], 4
      %s28 = int_to_ptr.vmem [resolvable:$true] %s27
      %33 = dma.hbm_to_vmem [thread:$0]  %s1, 8192, %s28, [#allocation6], 512, 512, 32
    $region9: #{tpu_custom_call.1} parent=1 // pred_fallthru
      _
    // Predicated region
    $region10: #{tpu_custom_call.1} parent=1 // pred_check
      _
    $region11: #{tpu_custom_call.1} parent=1 // pred_check_branch
      %35 = sbr.rel (0) target = $region13
    $region12: #{tpu_custom_call.1} parent=1 // pred_region
      %36 = dma.done [#allocation3], 128
    $region13: #{tpu_custom_call.1} parent=1 // pred_fallthru
      _
    // Predicated region
    $region14: #{tpu_custom_call.1} parent=1 // pred_check
      _
    $region15: #{tpu_custom_call.1} parent=1 // pred_check_branch
      %38 = sbr.rel (0) target = $region17
    $region16: #{tpu_custom_call.1} parent=1 // pred_region
      %39 = dma.done [#allocation6], 8192
    $region17: #{tpu_custom_call.1} parent=1 // pred_fallthru
      _
    %v41 = vld [vmem:[#allocation2] sm:$0xf]
    %v42 = vld [vmem:[#allocation2 + $0x4] sm:$0xf]
    %v43 = vld [vmem:[#allocation5] sm:$0xff]
    %v44 = vld [vmem:[#allocation5 + $0x8] sm:$0xff]
    %v45 = vld [vmem:[#allocation5 + $0x10] sm:$0xff]
    %v46 = vld [vmem:[#allocation5 + $0x18] sm:$0xff]
    %v47 = vld [vmem:[#allocation5 + $0x20] sm:$0xff]
    %v48 = vld [vmem:[#allocation5 + $0x28] sm:$0xff]
    %v49 = vld [vmem:[#allocation5 + $0x30] sm:$0xff]
    %v50 = vld [vmem:[#allocation5 + $0x38] sm:$0xff]
    %v51 = vld [vmem:[#allocation5 + $0x40] sm:$0xff]
    %v52 = vld [vmem:[#allocation5 + $0x48] sm:$0xff]
    %v53 = vld [vmem:[#allocation5 + $0x50] sm:$0xff]
    %v54 = vld [vmem:[#allocation5 + $0x58] sm:$0xff]
    %v55 = vld [vmem:[#allocation5 + $0x60] sm:$0xff]
    %v56 = vld [vmem:[#allocation5 + $0x68] sm:$0xff]
    %v57 = vld [vmem:[#allocation5 + $0x70] sm:$0xff]
    %v58 = vld [vmem:[#allocation5 + $0x78] sm:$0xff]
    %v59 = vld [vmem:[#allocation5 + $0x80] sm:$0xff]
    %v60 = vld [vmem:[#allocation5 + $0x88] sm:$0xff]
    %v61 = vld [vmem:[#allocation5 + $0x90] sm:$0xff]
    %v62 = vld [vmem:[#allocation5 + $0x98] sm:$0xff]
    %v63 = vld [vmem:[#allocation5 + $0xa0] sm:$0xff]
    %v64 = vld [vmem:[#allocation5 + $0xa8] sm:$0xff]
    %v65 = vld [vmem:[#allocation5 + $0xb0] sm:$0xff]
    %v66 = vld [vmem:[#allocation5 + $0xb8] sm:$0xff]
    %v67 = vld [vmem:[#allocation5 + $0xc0] sm:$0xff]
    %v68 = vld [vmem:[#allocation5 + $0xc8] sm:$0xff]
    %v69 = vld [vmem:[#allocation5 + $0xd0] sm:$0xff]
    %v70 = vld [vmem:[#allocation5 + $0xd8] sm:$0xff]
    %v71 = vld [vmem:[#allocation5 + $0xe0] sm:$0xff]
    %v72 = vld [vmem:[#allocation5 + $0xe8] sm:$0xff]
    %v73 = vld [vmem:[#allocation5 + $0xf0] sm:$0xff]
    %v74 = vld [vmem:[#allocation5 + $0xf8] sm:$0xff]
    %v75 = vld [vmem:[#allocation5 + $0x100] sm:$0xff]
    %v76 = vld [vmem:[#allocation5 + $0x108] sm:$0xff]
    %v77 = vld [vmem:[#allocation5 + $0x110] sm:$0xff]
    %v78 = vld [vmem:[#allocation5 + $0x118] sm:$0xff]
    %v79 = vld [vmem:[#allocation5 + $0x120] sm:$0xff]
    %v80 = vld [vmem:[#allocation5 + $0x128] sm:$0xff]
    %v81 = vld [vmem:[#allocation5 + $0x130] sm:$0xff]
    %v82 = vld [vmem:[#allocation5 + $0x138] sm:$0xff]
    %v83 = vld [vmem:[#allocation5 + $0x140] sm:$0xff]
    %v84 = vld [vmem:[#allocation5 + $0x148] sm:$0xff]
    %v85 = vld [vmem:[#allocation5 + $0x150] sm:$0xff]
    %v86 = vld [vmem:[#allocation5 + $0x158] sm:$0xff]
    %v87 = vld [vmem:[#allocation5 + $0x160] sm:$0xff]
    %v88 = vld [vmem:[#allocation5 + $0x168] sm:$0xff]
    %v89 = vld [vmem:[#allocation5 + $0x170] sm:$0xff]
    %v90 = vld [vmem:[#allocation5 + $0x178] sm:$0xff]
    %v91 = vld [vmem:[#allocation5 + $0x180] sm:$0xff]
    %v92 = vld [vmem:[#allocation5 + $0x188] sm:$0xff]
    %v93 = vld [vmem:[#allocation5 + $0x190] sm:$0xff]
    %v94 = vld [vmem:[#allocation5 + $0x198] sm:$0xff]
    %v95 = vld [vmem:[#allocation5 + $0x1a0] sm:$0xff]
    %v96 = vld [vmem:[#allocation5 + $0x1a8] sm:$0xff]
    %v97 = vld [vmem:[#allocation5 + $0x1b0] sm:$0xff]
    %v98 = vld [vmem:[#allocation5 + $0x1b8] sm:$0xff]
    %v99 = vld [vmem:[#allocation5 + $0x1c0] sm:$0xff]
    %v100 = vld [vmem:[#allocation5 + $0x1c8] sm:$0xff]
    %v101 = vld [vmem:[#allocation5 + $0x1d0] sm:$0xff]
    %v102 = vld [vmem:[#allocation5 + $0x1d8] sm:$0xff]
    %v103 = vld [vmem:[#allocation5 + $0x1e0] sm:$0xff]
    %v104 = vld [vmem:[#allocation5 + $0x1e8] sm:$0xff]
    %v105 = vld [vmem:[#allocation5 + $0x1f0] sm:$0xff]
    %v106 = vld [vmem:[#allocation5 + $0x1f8] sm:$0xff]
    %v109 = vunpack.c.l.b16 %v41
    %v110 = vunpack.c.l.b16 %v42
    %v111 = vpack.c.b16 %v110, %v109
    %v177 = vunpack.c.l.b16 %v43
    %v178 = vunpack.c.h.b16 %v43
    %v179 = vunpack.c.l.b16 %v44
    %v180 = vunpack.c.h.b16 %v44
    %v181 = vunpack.c.l.b16 %v45
    %v182 = vunpack.c.h.b16 %v45
    %v183 = vunpack.c.l.b16 %v46
    %v184 = vunpack.c.h.b16 %v46
    %v185 = vunpack.c.l.b16 %v47
    %v186 = vunpack.c.h.b16 %v47
    %v187 = vunpack.c.l.b16 %v48
    %v188 = vunpack.c.h.b16 %v48
    %v189 = vunpack.c.l.b16 %v49
    %v190 = vunpack.c.h.b16 %v49
    %v191 = vunpack.c.l.b16 %v50
    %v192 = vunpack.c.h.b16 %v50
    %v193 = vunpack.c.l.b16 %v51
    %v194 = vunpack.c.h.b16 %v51
    %v195 = vunpack.c.l.b16 %v52
    %v196 = vunpack.c.h.b16 %v52
    %v197 = vunpack.c.l.b16 %v53
    %v198 = vunpack.c.h.b16 %v53
    %v199 = vunpack.c.l.b16 %v54
    %v200 = vunpack.c.h.b16 %v54
    %v201 = vunpack.c.l.b16 %v55
    %v202 = vunpack.c.h.b16 %v55
    %v203 = vunpack.c.l.b16 %v56
    %v204 = vunpack.c.h.b16 %v56
    %v205 = vunpack.c.l.b16 %v57
    %v206 = vunpack.c.h.b16 %v57
    %v207 = vunpack.c.l.b16 %v58
    %v208 = vunpack.c.h.b16 %v58
    %v209 = vunpack.c.l.b16 %v59
    %v210 = vunpack.c.h.b16 %v59
    %v211 = vunpack.c.l.b16 %v60
    %v212 = vunpack.c.h.b16 %v60
    %v213 = vunpack.c.l.b16 %v61
    %v214 = vunpack.c.h.b16 %v61
    %v215 = vunpack.c.l.b16 %v62
    %v216 = vunpack.c.h.b16 %v62
    %v217 = vunpack.c.l.b16 %v63
    %v218 = vunpack.c.h.b16 %v63
    %v219 = vunpack.c.l.b16 %v64
    %v220 = vunpack.c.h.b16 %v64
    %v221 = vunpack.c.l.b16 %v65
    %v222 = vunpack.c.h.b16 %v65
    %v223 = vunpack.c.l.b16 %v66
    %v224 = vunpack.c.h.b16 %v66
    %v225 = vunpack.c.l.b16 %v67
    %v226 = vunpack.c.h.b16 %v67
    %v227 = vunpack.c.l.b16 %v68
    %v228 = vunpack.c.h.b16 %v68
    %v229 = vunpack.c.l.b16 %v69
    %v230 = vunpack.c.h.b16 %v69
    %v231 = vunpack.c.l.b16 %v70
    %v232 = vunpack.c.h.b16 %v70
    %v233 = vunpack.c.l.b16 %v71
    %v234 = vunpack.c.h.b16 %v71
    %v235 = vunpack.c.l.b16 %v72
    %v236 = vunpack.c.h.b16 %v72
    %v237 = vunpack.c.l.b16 %v73
    %v238 = vunpack.c.h.b16 %v73
    %v239 = vunpack.c.l.b16 %v74
    %v240 = vunpack.c.h.b16 %v74
    %v241 = vunpack.c.l.b16 %v75
    %v242 = vunpack.c.h.b16 %v75
    %v243 = vunpack.c.l.b16 %v76
    %v244 = vunpack.c.h.b16 %v76
    %v245 = vunpack.c.l.b16 %v77
    %v246 = vunpack.c.h.b16 %v77
    %v247 = vunpack.c.l.b16 %v78
    %v248 = vunpack.c.h.b16 %v78
    %v249 = vunpack.c.l.b16 %v79
    %v250 = vunpack.c.h.b16 %v79
    %v251 = vunpack.c.l.b16 %v80
    %v252 = vunpack.c.h.b16 %v80
    %v253 = vunpack.c.l.b16 %v81
    %v254 = vunpack.c.h.b16 %v81
    %v255 = vunpack.c.l.b16 %v82
    %v256 = vunpack.c.h.b16 %v82
    %v257 = vunpack.c.l.b16 %v83
    %v258 = vunpack.c.h.b16 %v83
    %v259 = vunpack.c.l.b16 %v84
    %v260 = vunpack.c.h.b16 %v84
    %v261 = vunpack.c.l.b16 %v85
    %v262 = vunpack.c.h.b16 %v85
    %v263 = vunpack.c.l.b16 %v86
    %v264 = vunpack.c.h.b16 %v86
    %v265 = vunpack.c.l.b16 %v87
    %v266 = vunpack.c.h.b16 %v87
    %v267 = vunpack.c.l.b16 %v88
    %v268 = vunpack.c.h.b16 %v88
    %v269 = vunpack.c.l.b16 %v89
    %v270 = vunpack.c.h.b16 %v89
    %v271 = vunpack.c.l.b16 %v90
    %v272 = vunpack.c.h.b16 %v90
    %v273 = vunpack.c.l.b16 %v91
    %v274 = vunpack.c.h.b16 %v91
    %v275 = vunpack.c.l.b16 %v92
    %v276 = vunpack.c.h.b16 %v92
    %v277 = vunpack.c.l.b16 %v93
    %v278 = vunpack.c.h.b16 %v93
    %v279 = vunpack.c.l.b16 %v94
    %v280 = vunpack.c.h.b16 %v94
    %v281 = vunpack.c.l.b16 %v95
    %v282 = vunpack.c.h.b16 %v95
    %v283 = vunpack.c.l.b16 %v96
    %v284 = vunpack.c.h.b16 %v96
    %v285 = vunpack.c.l.b16 %v97
    %v286 = vunpack.c.h.b16 %v97
    %v287 = vunpack.c.l.b16 %v98
    %v288 = vunpack.c.h.b16 %v98
    %v289 = vunpack.c.l.b16 %v99
    %v290 = vunpack.c.h.b16 %v99
    %v291 = vunpack.c.l.b16 %v100
    %v292 = vunpack.c.h.b16 %v100
    %v293 = vunpack.c.l.b16 %v101
    %v294 = vunpack.c.h.b16 %v101
    %v295 = vunpack.c.l.b16 %v102
    %v296 = vunpack.c.h.b16 %v102
    %v297 = vunpack.c.l.b16 %v103
    %v298 = vunpack.c.h.b16 %v103
    %v299 = vunpack.c.l.b16 %v104
    %v300 = vunpack.c.h.b16 %v104
    %v301 = vunpack.c.l.b16 %v105
    %v302 = vunpack.c.h.b16 %v105
    %v303 = vunpack.c.l.b16 %v106
    %v304 = vunpack.c.h.b16 %v106
    %v305 = vpack.c.b16 %v185, %v177
    %v306 = vpack.c.b16 %v186, %v178
    %v307 = vpack.c.b16 %v187, %v179
    %v308 = vpack.c.b16 %v188, %v180
    %v309 = vpack.c.b16 %v189, %v181
    %v310 = vpack.c.b16 %v190, %v182
    %v311 = vpack.c.b16 %v191, %v183
    %v312 = vpack.c.b16 %v192, %v184
    %v313 = vpack.c.b16 %v201, %v193
    %v314 = vpack.c.b16 %v202, %v194
    %v315 = vpack.c.b16 %v203, %v195
    %v316 = vpack.c.b16 %v204, %v196
    %v317 = vpack.c.b16 %v205, %v197
    %v318 = vpack.c.b16 %v206, %v198
    %v319 = vpack.c.b16 %v207, %v199
    %v320 = vpack.c.b16 %v208, %v200
    %v321 = vpack.c.b16 %v217, %v209
    %v322 = vpack.c.b16 %v218, %v210
    %v323 = vpack.c.b16 %v219, %v211
    %v324 = vpack.c.b16 %v220, %v212
    %v325 = vpack.c.b16 %v221, %v213
    %v326 = vpack.c.b16 %v222, %v214
    %v327 = vpack.c.b16 %v223, %v215
    %v328 = vpack.c.b16 %v224, %v216
    %v329 = vpack.c.b16 %v233, %v225
    %v330 = vpack.c.b16 %v234, %v226
    %v331 = vpack.c.b16 %v235, %v227
    %v332 = vpack.c.b16 %v236, %v228
    %v333 = vpack.c.b16 %v237, %v229
    %v334 = vpack.c.b16 %v238, %v230
    %v335 = vpack.c.b16 %v239, %v231
    %v336 = vpack.c.b16 %v240, %v232
    %v337 = vpack.c.b16 %v249, %v241
    %v338 = vpack.c.b16 %v250, %v242
    %v339 = vpack.c.b16 %v251, %v243
    %v340 = vpack.c.b16 %v252, %v244
    %v341 = vpack.c.b16 %v253, %v245
    %v342 = vpack.c.b16 %v254, %v246
    %v343 = vpack.c.b16 %v255, %v247
    %v344 = vpack.c.b16 %v256, %v248
    %v345 = vpack.c.b16 %v265, %v257
    %v346 = vpack.c.b16 %v266, %v258
    %v347 = vpack.c.b16 %v267, %v259
    %v348 = vpack.c.b16 %v268, %v260
    %v349 = vpack.c.b16 %v269, %v261
    %v350 = vpack.c.b16 %v270, %v262
    %v351 = vpack.c.b16 %v271, %v263
    %v352 = vpack.c.b16 %v272, %v264
    %v353 = vpack.c.b16 %v281, %v273
    %v354 = vpack.c.b16 %v282, %v274
    %v355 = vpack.c.b16 %v283, %v275
    %v356 = vpack.c.b16 %v284, %v276
    %v357 = vpack.c.b16 %v285, %v277
    %v358 = vpack.c.b16 %v286, %v278
    %v359 = vpack.c.b16 %v287, %v279
    %v360 = vpack.c.b16 %v288, %v280
    %v361 = vpack.c.b16 %v297, %v289
    %v362 = vpack.c.b16 %v298, %v290
    %v363 = vpack.c.b16 %v299, %v291
    %v364 = vpack.c.b16 %v300, %v292
    %v365 = vpack.c.b16 %v301, %v293
    %v366 = vpack.c.b16 %v302, %v294
    %v367 = vpack.c.b16 %v303, %v295
    %v368 = vpack.c.b16 %v304, %v296
    %433 = vmatprep.subr.bf16.mxu0 %v362
    %434 = vmatpush1.bf16.msra.mxu0 %v361
    %435 = vmatprep.subr.bf16.mxu0 %v354
    %436 = vmatpush1.bf16.msra.mxu0 %v353
    %437 = vmatprep.subr.bf16.mxu0 %v346
    %438 = vmatpush1.bf16.msra.mxu0 %v345
    %439 = vmatprep.subr.bf16.mxu0 %v338
    %440 = vmatpush1.bf16.msra.mxu0 %v337
    %441 = vmatprep.subr.bf16.mxu0 %v330
    %442 = vmatpush1.bf16.msra.mxu0 %v329
    %443 = vmatprep.subr.bf16.mxu0 %v322
    %444 = vmatpush1.bf16.msra.mxu0 %v321
    %445 = vmatprep.subr.bf16.mxu0 %v314
    %446 = vmatpush1.bf16.msra.mxu0 %v313
    %447 = vmatprep.subr.bf16.mxu0 %v306
    %448 = vmatpush1.bf16.msra.mxu0 %v305
    %449 = vmatprep.subr.bf16.mxu0 0
    %450 = vmatpush2.bf16.msra.mxu0 0
    %451 = vmatprep.subr.bf16.mxu0 0
    %452 = vmatpush2.bf16.msra.mxu0 0
    %453 = vmatprep.subr.bf16.mxu0 0
    %454 = vmatpush2.bf16.msra.mxu0 0
    %455 = vmatprep.subr.bf16.mxu0 0
    %456 = vmatpush2.bf16.msra.mxu0 0
    %457 = vmatprep.subr.bf16.mxu0 0
    %458 = vmatpush2.bf16.msra.mxu0 0
    %459 = vmatprep.subr.bf16.mxu0 0
    %460 = vmatpush2.bf16.msra.mxu0 0
    %461 = vmatprep.subr.bf16.mxu0 0
    %462 = vmatpush2.bf16.msra.mxu0 0
    %463 = vmatprep.subr.bf16.mxu0 0
    %464 = vmatpush2.bf16.msra.mxu0 0
    %465 = vmatprep.mubr.bf16.mxu0 0
    %466 = vmatmul.mubr.bf16.gmra.mxu0 %v111
    %v467 = vpop.f32.mrf.mxu0
    %v468 = vadd.f32 0.0, %v467
    %v469 = vpop.f32.mrf.mxu0
    %v470 = vadd.f32 0.0, %v469
    %v471 = vpop.f32.mrf.mxu0
    %v472 = vadd.f32 0.0, %v471
    %v473 = vpop.f32.mrf.mxu0
    %v474 = vadd.f32 0.0, %v473
    %475 = vdwg.mxu0
    %476 = vmatprep.subr.bf16.mxu0 %v364
    %477 = vmatpush1.bf16.msra.mxu0 %v363
    %478 = vmatprep.subr.bf16.mxu0 %v356
    %479 = vmatpush1.bf16.msra.mxu0 %v355
    %480 = vmatprep.subr.bf16.mxu0 %v348
    %481 = vmatpush1.bf16.msra.mxu0 %v347
    %482 = vmatprep.subr.bf16.mxu0 %v340
    %483 = vmatpush1.bf16.msra.mxu0 %v339
    %484 = vmatprep.subr.bf16.mxu0 %v332
    %485 = vmatpush1.bf16.msra.mxu0 %v331
    %486 = vmatprep.subr.bf16.mxu0 %v324
    %487 = vmatpush1.bf16.msra.mxu0 %v323
    %488 = vmatprep.subr.bf16.mxu0 %v316
    %489 = vmatpush1.bf16.msra.mxu0 %v315
    %490 = vmatprep.subr.bf16.mxu0 %v308
    %491 = vmatpush1.bf16.msra.mxu0 %v307
    %492 = vmatprep.subr.bf16.mxu0 0
    %493 = vmatpush2.bf16.msra.mxu0 0
    %494 = vmatprep.subr.bf16.mxu0 0
    %495 = vmatpush2.bf16.msra.mxu0 0
    %496 = vmatprep.subr.bf16.mxu0 0
    %497 = vmatpush2.bf16.msra.mxu0 0
    %498 = vmatprep.subr.bf16.mxu0 0
    %499 = vmatpush2.bf16.msra.mxu0 0
    %500 = vmatprep.subr.bf16.mxu0 0
    %501 = vmatpush2.bf16.msra.mxu0 0
    %502 = vmatprep.subr.bf16.mxu0 0
    %503 = vmatpush2.bf16.msra.mxu0 0
    %504 = vmatprep.subr.bf16.mxu0 0
    %505 = vmatpush2.bf16.msra.mxu0 0
    %506 = vmatprep.subr.bf16.mxu0 0
    %507 = vmatpush2.bf16.msra.mxu0 0
    %508 = vmatprep.mubr.bf16.mxu0 0
    %509 = vmatmul.mubr.bf16.gmra.mxu0 %v111
    %v510 = vpop.f32.mrf.mxu0
    %v511 = vadd.f32 0.0, %v510
    %v512 = vpop.f32.mrf.mxu0
    %v513 = vadd.f32 0.0, %v512
    %v514 = vpop.f32.mrf.mxu0
    %v515 = vadd.f32 0.0, %v514
    %v516 = vpop.f32.mrf.mxu0
    %v517 = vadd.f32 0.0, %v516
    %518 = vdwg.mxu0
    %519 = vmatprep.subr.bf16.mxu0 %v366
    %520 = vmatpush1.bf16.msra.mxu0 %v365
    %521 = vmatprep.subr.bf16.mxu0 %v358
    %522 = vmatpush1.bf16.msra.mxu0 %v357
    %523 = vmatprep.subr.bf16.mxu0 %v350
    %524 = vmatpush1.bf16.msra.mxu0 %v349
    %525 = vmatprep.subr.bf16.mxu0 %v342
    %526 = vmatpush1.bf16.msra.mxu0 %v341
    %527 = vmatprep.subr.bf16.mxu0 %v334
    %528 = vmatpush1.bf16.msra.mxu0 %v333
    %529 = vmatprep.subr.bf16.mxu0 %v326
    %530 = vmatpush1.bf16.msra.mxu0 %v325
    %531 = vmatprep.subr.bf16.mxu0 %v318
    %532 = vmatpush1.bf16.msra.mxu0 %v317
    %533 = vmatprep.subr.bf16.mxu0 %v310
    %534 = vmatpush1.bf16.msra.mxu0 %v309
    %535 = vmatprep.subr.bf16.mxu0 0
    %536 = vmatpush2.bf16.msra.mxu0 0
    %537 = vmatprep.subr.bf16.mxu0 0
    %538 = vmatpush2.bf16.msra.mxu0 0
    %539 = vmatprep.subr.bf16.mxu0 0
    %540 = vmatpush2.bf16.msra.mxu0 0
    %541 = vmatprep.subr.bf16.mxu0 0
    %542 = vmatpush2.bf16.msra.mxu0 0
    %543 = vmatprep.subr.bf16.mxu0 0
    %544 = vmatpush2.bf16.msra.mxu0 0
    %545 = vmatprep.subr.bf16.mxu0 0
    %546 = vmatpush2.bf16.msra.mxu0 0
    %547 = vmatprep.subr.bf16.mxu0 0
    %548 = vmatpush2.bf16.msra.mxu0 0
    %549 = vmatprep.subr.bf16.mxu0 0
    %550 = vmatpush2.bf16.msra.mxu0 0
    %551 = vmatprep.mubr.bf16.mxu0 0
    %552 = vmatmul.mubr.bf16.gmra.mxu0 %v111
    %v553 = vpop.f32.mrf.mxu0
    %v554 = vadd.f32 0.0, %v553
    %v555 = vpop.f32.mrf.mxu0
    %v556 = vadd.f32 0.0, %v555
    %v557 = vpop.f32.mrf.mxu0
    %v558 = vadd.f32 0.0, %v557
    %v559 = vpop.f32.mrf.mxu0
    %v560 = vadd.f32 0.0, %v559
    %561 = vdwg.mxu0
    %562 = vmatprep.subr.bf16.mxu0 %v368
    %563 = vmatpush1.bf16.msra.mxu0 %v367
    %564 = vmatprep.subr.bf16.mxu0 %v360
    %565 = vmatpush1.bf16.msra.mxu0 %v359
    %566 = vmatprep.subr.bf16.mxu0 %v352
    %567 = vmatpush1.bf16.msra.mxu0 %v351
    %568 = vmatprep.subr.bf16.mxu0 %v344
    %569 = vmatpush1.bf16.msra.mxu0 %v343
    %570 = vmatprep.subr.bf16.mxu0 %v336
    %571 = vmatpush1.bf16.msra.mxu0 %v335
    %572 = vmatprep.subr.bf16.mxu0 %v328
    %573 = vmatpush1.bf16.msra.mxu0 %v327
    %574 = vmatprep.subr.bf16.mxu0 %v320
    %575 = vmatpush1.bf16.msra.mxu0 %v319
    %576 = vmatprep.subr.bf16.mxu0 %v312
    %577 = vmatpush1.bf16.msra.mxu0 %v311
    %578 = vmatprep.subr.bf16.mxu0 0
    %579 = vmatpush2.bf16.msra.mxu0 0
    %580 = vmatprep.subr.bf16.mxu0 0
    %581 = vmatpush2.bf16.msra.mxu0 0
    %582 = vmatprep.subr.bf16.mxu0 0
    %583 = vmatpush2.bf16.msra.mxu0 0
    %584 = vmatprep.subr.bf16.mxu0 0
    %585 = vmatpush2.bf16.msra.mxu0 0
    %586 = vmatprep.subr.bf16.mxu0 0
    %587 = vmatpush2.bf16.msra.mxu0 0
    %588 = vmatprep.subr.bf16.mxu0 0
    %589 = vmatpush2.bf16.msra.mxu0 0
    %590 = vmatprep.subr.bf16.mxu0 0
    %591 = vmatpush2.bf16.msra.mxu0 0
    %592 = vmatprep.subr.bf16.mxu0 0
    %593 = vmatpush2.bf16.msra.mxu0 0
    %594 = vmatprep.mubr.bf16.mxu0 0
    %595 = vmatmul.mubr.bf16.gmra.mxu0 %v111
    %v596 = vpop.f32.mrf.mxu0
    %v597 = vadd.f32 0.0, %v596
    %v598 = vpop.f32.mrf.mxu0
    %v599 = vadd.f32 0.0, %v598
    %v600 = vpop.f32.mrf.mxu0
    %v601 = vadd.f32 0.0, %v600
    %v602 = vpop.f32.mrf.mxu0
    %v603 = vadd.f32 0.0, %v602
    %604 = vdwg.mxu0
    %v605 = vand.u32 2147483647, %v468
    %v606 = vand.u32 2147483647, %v470
    %v607 = vand.u32 2147483647, %v511
    %v608 = vand.u32 2147483647, %v513
    %v609 = vand.u32 2147483647, %v554
    %v610 = vand.u32 2147483647, %v556
    %v611 = vand.u32 2147483647, %v597
    %v612 = vand.u32 2147483647, %v599
    %v613 = vand.u32 2147483647, %v472
    %v614 = vand.u32 2147483647, %v474
    %v615 = vand.u32 2147483647, %v515
    %v616 = vand.u32 2147483647, %v517
    %v617 = vand.u32 2147483647, %v558
    %v618 = vand.u32 2147483647, %v560
    %v619 = vand.u32 2147483647, %v601
    %v620 = vand.u32 2147483647, %v603
    %621 = vst [vmem:[#allocation7] sm:$0xff] %v605
    %622 = vst [vmem:[#allocation7 + $0x8] sm:$0xff] %v606
    %623 = vst [vmem:[#allocation7 + $0x10] sm:$0xff] %v607
    %624 = vst [vmem:[#allocation7 + $0x18] sm:$0xff] %v608
    %625 = vst [vmem:[#allocation7 + $0x20] sm:$0xff] %v609
    %626 = vst [vmem:[#allocation7 + $0x28] sm:$0xff] %v610
    %627 = vst [vmem:[#allocation7 + $0x30] sm:$0xff] %v611
    %628 = vst [vmem:[#allocation7 + $0x38] sm:$0xff] %v612
    %629 = vst [vmem:[#allocation7 + $0x40] sm:$0xff] %v613
    %630 = vst [vmem:[#allocation7 + $0x48] sm:$0xff] %v614
    %631 = vst [vmem:[#allocation7 + $0x50] sm:$0xff] %v615
    %632 = vst [vmem:[#allocation7 + $0x58] sm:$0xff] %v616
    %633 = vst [vmem:[#allocation7 + $0x60] sm:$0xff] %v617
    %634 = vst [vmem:[#allocation7 + $0x68] sm:$0xff] %v618
    %635 = vst [vmem:[#allocation7 + $0x70] sm:$0xff] %v619
    %636 = vst [vmem:[#allocation7 + $0x78] sm:$0xff] %v620
    // Predicated region
    $region18: #{tpu_custom_call.1} parent=1 // pred_check
      _
    $region19: #{tpu_custom_call.1} parent=1 // pred_check_branch
      %638 = sbr.rel (0) target = $region21
    $region20: #{tpu_custom_call.1} parent=1 // pred_region
      %s640 = ssub.s32 2048, 2048
      %641 = vsyncadd [#allocation4], %s640
      %s642 = sshll.u32 [#allocation7], 4
      %s643 = int_to_ptr.vmem [resolvable:$true] %s642
      %648 = dma.vmem_to_hbm [thread:$0]  %s643, 2048, %s2, [#allocation4], 1024, 1024, 64
    $region21: #{tpu_custom_call.1} parent=1 // pred_fallthru
      _
    // Predicated region
    $region22: #{tpu_custom_call.1} parent=1 // pred_check
      _
    $region23: #{tpu_custom_call.1} parent=1 // pred_check_branch
      %650 = sbr.rel (0) target = $region25
    $region24: #{tpu_custom_call.1} parent=1 // pred_region
      %651 = dma.done [#allocation4], 2048
    $region25: #{tpu_custom_call.1} parent=1 // pred_fallthru
      _
    %652 = vsyncpa [#allocation3], 1
    %653 = vsyncpa [#allocation6], 1
    %654 = vsyncpa [#allocation4], 1

</llo_original>
